<compile_context>
chip_gen: v5e
topology: v5e:2x2
jax: 0.10.0
libtpu: 0.0.40
codegen_flags: <defaults>
</compile_context>

<pallas_src>
import numpy as np
import jax
import jax.numpy as jnp
from jax.experimental import pallas as pl
from jax.experimental.pallas import tpu as pltpu


# ---------------------------------------------------------------------------
# Pallas kernel: one batch element per grid step.
#   x_ref    : (1, 2C+1, HW)  = [x1 ; x2 ; ones]  (ones row absorbs biases)
#   pt_ref   : (16, HW)       pooling matrix (AdaptiveAvgPool2d(6,6) + crop)^T
#   wkv_ref  : (4*Ch, 2C+1)   rows [k1; k2; v1; v2], bias in last column
#   wq_ref   : (2*Ch, 2C+1)   rows [q1; q2], bias in last column
#   wout_ref : (2C, 2*Ch)     blockdiag(gamma1*Wc2, gamma2*Wc1)
#   c_ref    : (2C, 1)        [gamma1*bc2 ; gamma2*bc1]
#   out_ref  : (1, 2C, HW)    rows [out1 ; out2]
# ---------------------------------------------------------------------------
def tc_kernel(x_ref, pt_ref, wkv_ref, wq_ref, wout_ref, c_ref, out_ref):
    f32 = jnp.float32
    C2 = out_ref.shape[1]          # 2*C
    Ch = C2 // 4                   # C // 2

    xa = x_ref[0]                  # (2C+1, HW)

    # ---- all four key/value 1x1 convs (+ biases) : ONE MXU matmul ---------
    kv = jnp.dot(wkv_ref[...], xa, preferred_element_type=f32)   # (4Ch, HW)
    k1 = kv[0:Ch]                  # (Ch, HW)
    k2 = kv[Ch:2 * Ch]
    v = kv[2 * Ch:4 * Ch]          # (2Ch, HW) = [v1 ; v2]

    # ---- both query 1x1 convs (+ biases), then in-kernel adaptive pooling -
    yq = jnp.dot(wq_ref[...], xa, preferred_element_type=f32)    # (2Ch, HW)
    # pooled+cropped queries, transposed to (positions, channels):
    #   q^T = P^T @ yq^T   (columns of P sum to 1, so the bias pools exactly)
    q1t = jnp.dot(pt_ref[...], yq[0:Ch].T, preferred_element_type=f32)       # (16, Ch)
    q2t = jnp.dot(pt_ref[...], yq[Ch:2 * Ch].T, preferred_element_type=f32)  # (16, Ch)

    # ---- attention logits for both branches, stacked ----------------------
    e2 = jnp.dot(q1t, k2, preferred_element_type=f32)            # (16, HW)
    e1 = jnp.dot(q2t, k1, preferred_element_type=f32)            # (16, HW)
    e = jnp.concatenate([e2, e1], axis=0)                        # (2Ch, HW)

    e = e - jnp.max(e, axis=-1, keepdims=True)
    pe = jnp.exp(e)
    att = pe / jnp.sum(pe, axis=-1, keepdims=True)               # [att2; att1]

    # ---- v * attention, then BOTH output 1x1 convs as one block-diag matmul
    o = v * att                                                  # (2Ch, HW)
    delta = jnp.dot(wout_ref[...], o, preferred_element_type=f32) + c_ref[...]
    out_ref[0] = xa[0:C2] + delta


# ---------------------------------------------------------------------------
# Constant pooling matrix: AdaptiveAvgPool2d((6,6)) then [1:-1,1:-1] crop,
# returned transposed as (16, H*W); matches torch's window arithmetic.
# ---------------------------------------------------------------------------
def _crop_pool_matrix_T(H, W, pool=6, crop=1):
    n_side = pool - 2 * crop
    PT = np.zeros((n_side * n_side, H * W), np.float32)
    for oi, i in enumerate(range(crop, pool - crop)):
        hs, he = (i * H) // pool, -((-(i + 1) * H) // pool)
        for oj, j in enumerate(range(crop, pool - crop)):
            ws, we = (j * W) // pool, -((-(j + 1) * W) // pool)
            inv = 1.0 / ((he - hs) * (we - ws))
            for h in range(hs, he):
                PT[oi * n_side + oj, h * W + ws:h * W + we] = inv
    return PT


# ---------------------------------------------------------------------------
# Wrapper: packs weights / biases and calls the kernel.
# ---------------------------------------------------------------------------
@jax.jit
def tc_forward(x1, x2, p):
    B, C, H, W = x1.shape
    HW = H * W
    Ch = C // 2
    assert Ch == 16, "torch.mul broadcast in TC.forward requires in_dim // 2 == 16"
    f32 = jnp.float32
    C2 = 2 * C

    # augmented per-batch input: [x1 ; x2 ; ones]  -> biases absorbed on MXU
    xa = jnp.concatenate(
        [x1.reshape(B, C, HW).astype(f32),
         x2.reshape(B, C, HW).astype(f32),
         jnp.ones((B, 1, HW), f32)], axis=1)                     # (B, 2C+1, HW)

    PT = jnp.asarray(_crop_pool_matrix_T(H, W))                  # (16, HW)

    Z = jnp.zeros((Ch, C), f32)
    col = lambda b: b.reshape(-1, 1).astype(f32)
    # rows: [k1; k2; v1; v2], last column = bias
    wkv = jnp.concatenate([
        jnp.concatenate([p['wk1'], Z, col(p['bk1'])], axis=1),
        jnp.concatenate([Z, p['wk2'], col(p['bk2'])], axis=1),
        jnp.concatenate([p['wv1'], Z, col(p['bv1'])], axis=1),
        jnp.concatenate([Z, p['wv2'], col(p['bv2'])], axis=1)], axis=0)      # (4Ch, 2C+1)
    wq = jnp.concatenate([
        jnp.concatenate([p['wq1'], Z, col(p['bq1'])], axis=1),
        jnp.concatenate([Z, p['wq2'], col(p['bq2'])], axis=1)], axis=0)      # (2Ch, 2C+1)

    g1 = jnp.asarray(p['gamma1'], f32)
    g2 = jnp.asarray(p['gamma2'], f32)
    ZC = jnp.zeros((C, Ch), f32)
    wout = jnp.concatenate([
        jnp.concatenate([g1 * p['wc2'], ZC], axis=1),
        jnp.concatenate([ZC, g2 * p['wc1']], axis=1)], axis=0)               # (2C, 2Ch)
    cout = jnp.concatenate([g1 * p['bc2'], g2 * p['bc1']]).reshape(C2, 1)    # (2C, 1)

    full = lambda a: pl.BlockSpec(a.shape, lambda b: (0, 0))
    out = pl.pallas_call(
        tc_kernel,
        grid=(B,),
        in_specs=[
            pl.BlockSpec((1, C2 + 1, HW), lambda b: (b, 0, 0)),
            full(PT), full(wkv), full(wq), full(wout), full(cout),
        ],
        out_specs=pl.BlockSpec((1, C2, HW), lambda b: (b, 0, 0)),
        out_shape=jax.ShapeDtypeStruct((B, C2, HW), f32),
        compiler_params=pltpu.CompilerParams(
            dimension_semantics=("parallel",)),       # -> both TCs on v7x
    )(xa, PT, wkv, wq, wout, cout)

    return (out[:, :C].reshape(B, C, H, W),
            out[:, C:].reshape(B, C, H, W))


# ---------------------------------------------------------------------------
# Parameters & pure-JAX reference (mirrors the PyTorch forward exactly)
# ---------------------------------------------------------------------------
def init_params(key, in_dim):
    C, Ch = in_dim, in_dim // 2
    ks = jax.random.split(key, 16)
    w = lambda k, o, i: 0.1 * jax.random.normal(k, (o, i), jnp.float32)
    bv = lambda k, o: 0.1 * jax.random.normal(k, (o,), jnp.float32)
    return dict(
        wq1=w(ks[0], Ch, C), bq1=bv(ks[1], Ch),
        wk1=w(ks[2], Ch, C), bk1=bv(ks[3], Ch),
        wv1=w(ks[4], Ch, C), bv1=bv(ks[5], Ch),
        wq2=w(ks[6], Ch, C), bq2=bv(ks[7], Ch),
        wk2=w(ks[8], Ch, C), bk2=bv(ks[9], Ch),
        wv2=w(ks[10], Ch, C), bv2=bv(ks[11], Ch),
        wc1=w(ks[12], C, Ch), bc1=bv(ks[13], C),
        wc2=w(ks[14], C, Ch), bc2=bv(ks[15], C),
        # PyTorch inits these to 0; nonzero here so the attention path matters.
        gamma1=jnp.float32(0.5), gamma2=jnp.float32(0.25),
    )


def adaptive_avg_pool2d(x, out_hw):
    B, C, H, W = x.shape
    oh, ow = out_hw
    rows = []
    for i in range(oh):
        hs = (i * H) // oh
        he = -((-(i + 1) * H) // oh)
        cols = []
        for j in range(ow):
            ws = (j * W) // ow
            we = -((-(j + 1) * W) // ow)
            cols.append(jnp.mean(x[:, :, hs:he, ws:we], axis=(2, 3)))
        rows.append(jnp.stack(cols, axis=-1))
    return jnp.stack(rows, axis=-2)


def _conv1x1(x, w, b):
    return jnp.einsum('oc,bchw->bohw', w, x) + b[None, :, None, None]


def tc_reference(x1, x2, p):
    B, C, H, W = x1.shape
    Ch, HW = C // 2, H * W
    q1 = adaptive_avg_pool2d(_conv1x1(x1, p['wq1'], p['bq1']), (6, 6))[:, :, 1:-1, 1:-1]
    q1 = jnp.transpose(q1.reshape(B, Ch, -1), (0, 2, 1))
    k1 = _conv1x1(x1, p['wk1'], p['bk1']).reshape(B, Ch, HW)
    v1 = _conv1x1(x1, p['wv1'], p['bv1']).reshape(B, Ch, HW)
    q2 = adaptive_avg_pool2d(_conv1x1(x2, p['wq2'], p['bq2']), (6, 6))[:, :, 1:-1, 1:-1]
    q2 = jnp.transpose(q2.reshape(B, Ch, -1), (0, 2, 1))
    k2 = _conv1x1(x2, p['wk2'], p['bk2']).reshape(B, Ch, HW)
    v2 = _conv1x1(x2, p['wv2'], p['bv2']).reshape(B, Ch, HW)
    att2 = jax.nn.softmax(jnp.einsum('bpc,bcn->bpn', q1, k2), axis=-1)
    o1 = _conv1x1((v1 * att2).reshape(B, Ch, H, W), p['wc2'], p['bc2'])
    att1 = jax.nn.softmax(jnp.einsum('bpc,bcn->bpn', q2, k1), axis=-1)
    o2 = _conv1x1((v2 * att1).reshape(B, Ch, H, W), p['wc1'], p['bc1'])
    return x1 + p['gamma1'] * o1, x2 + p['gamma2'] * o2


if __name__ == "__main__":
    key = jax.random.PRNGKey(0)
    kx1, kx2, kp = jax.random.split(key, 3)
    B, C, H, W = 2, 32, 16, 16   # in_dim = 32 is forced by the torch.mul broadcast
    x1 = jax.random.normal(kx1, (B, C, H, W), jnp.float32)
    x2 = jax.random.normal(kx2, (B, C, H, W), jnp.float32)
    params = init_params(kp, C)

    out1, out2 = tc_forward(x1, x2, params)
    jax.block_until_ready((out1, out2))

    r1, r2 = tc_reference(x1, x2, params)
    assert jnp.allclose(out1, r1, atol=2e-4, rtol=2e-4)
    assert jnp.allclose(out2, r2, atol=2e-4, rtol=2e-4)
    print("KERNEL_OK")
</pallas_src>

<mosaic_0001>
module attributes {stable_mosaic.version = 11 : i64} {
  func.func @tc_kernel(%arg0: i32, %arg1: memref<1x65x256xf32, #tpu.memory_space<vmem>>, %arg2: memref<16x256xf32, #tpu.memory_space<vmem>>, %arg3: memref<64x65xf32, #tpu.memory_space<vmem>>, %arg4: memref<32x65xf32, #tpu.memory_space<vmem>>, %arg5: memref<64x32xf32, #tpu.memory_space<vmem>>, %arg6: memref<64x1xf32, #tpu.memory_space<vmem>>, %arg7: memref<1x64x256xf32, #tpu.memory_space<vmem>>) attributes {dimension_semantics = [#tpu.dimension_semantics<parallel>], iteration_bounds = array<i64: 2>, scalar_prefetch = 0 : i64, scratch_operands = 0 : i64, tpu.core_type = #tpu.core_type<tc>, window_params = [{transform_indices = @transform_0, window_bounds = array<i64: 1, 65, 256>}, {pipeline_mode = #tpu.pipeline_mode<synchronous>, transform_indices = @transform_1, window_bounds = array<i64: 16, 256>}, {pipeline_mode = #tpu.pipeline_mode<synchronous>, transform_indices = @transform_2, window_bounds = array<i64: 64, 65>}, {pipeline_mode = #tpu.pipeline_mode<synchronous>, transform_indices = @transform_3, window_bounds = array<i64: 32, 65>}, {pipeline_mode = #tpu.pipeline_mode<synchronous>, transform_indices = @transform_4, window_bounds = array<i64: 64, 32>}, {pipeline_mode = #tpu.pipeline_mode<synchronous>, transform_indices = @transform_5, window_bounds = array<i64: 64, 1>}, {transform_indices = @transform_6, window_bounds = array<i64: 1, 64, 256>}]} {
    %c0 = arith.constant 0 : index
    %c0_0 = arith.constant 0 : index
    %c0_1 = arith.constant 0 : index
    %0 = vector.load %arg1[%c0, %c0_0, %c0_1] : memref<1x65x256xf32, #tpu.memory_space<vmem>>, vector<1x65x256xf32>
    %1 = vector.shape_cast %0 : vector<1x65x256xf32> to vector<65x256xf32>
    %c0_2 = arith.constant 0 : index
    %c0_3 = arith.constant 0 : index
    %2 = vector.load %arg3[%c0_2, %c0_3] : memref<64x65xf32, #tpu.memory_space<vmem>>, vector<64x65xf32>
    %cst = arith.constant dense<0.000000e+00> : vector<64x256xf32>
    %3 = tpu.matmul %2, %1, %cst {dimension_numbers = #tpu.dot_dimension_numbers<[1], [0], [0], [1], [0, 0, 1, 1], [], []>} : vector<64x65xf32>, vector<65x256xf32>, vector<64x256xf32> -> vector<64x256xf32>
    %4 = vector.extract_strided_slice %3 {offsets = [0, 0], sizes = [16, 256], strides = [1, 1]} : vector<64x256xf32> to vector<16x256xf32>
    %5 = vector.extract_strided_slice %3 {offsets = [16, 0], sizes = [16, 256], strides = [1, 1]} : vector<64x256xf32> to vector<16x256xf32>
    %6 = vector.extract_strided_slice %3 {offsets = [32, 0], sizes = [32, 256], strides = [1, 1]} : vector<64x256xf32> to vector<32x256xf32>
    %c0_4 = arith.constant 0 : index
    %c0_5 = arith.constant 0 : index
    %7 = vector.load %arg4[%c0_4, %c0_5] : memref<32x65xf32, #tpu.memory_space<vmem>>, vector<32x65xf32>
    %cst_6 = arith.constant dense<0.000000e+00> : vector<32x256xf32>
    %8 = tpu.matmul %7, %1, %cst_6 {dimension_numbers = #tpu.dot_dimension_numbers<[1], [0], [0], [1], [0, 0, 1, 1], [], []>} : vector<32x65xf32>, vector<65x256xf32>, vector<32x256xf32> -> vector<32x256xf32>
    %c0_7 = arith.constant 0 : index
    %c0_8 = arith.constant 0 : index
    %9 = vector.load %arg2[%c0_7, %c0_8] : memref<16x256xf32, #tpu.memory_space<vmem>>, vector<16x256xf32>
    %10 = vector.extract_strided_slice %8 {offsets = [0, 0], sizes = [16, 256], strides = [1, 1]} : vector<32x256xf32> to vector<16x256xf32>
    %11 = tpu.transpose %10, [1, 0] : vector<16x256xf32> -> vector<256x16xf32>
    %cst_9 = arith.constant dense<0.000000e+00> : vector<16x16xf32>
    %12 = tpu.matmul %9, %11, %cst_9 {dimension_numbers = #tpu.dot_dimension_numbers<[1], [0], [0], [1], [0, 0, 1, 1], [], []>} : vector<16x256xf32>, vector<256x16xf32>, vector<16x16xf32> -> vector<16x16xf32>
    %c0_10 = arith.constant 0 : index
    %c0_11 = arith.constant 0 : index
    %13 = vector.load %arg2[%c0_10, %c0_11] : memref<16x256xf32, #tpu.memory_space<vmem>>, vector<16x256xf32>
    %14 = vector.extract_strided_slice %8 {offsets = [16, 0], sizes = [16, 256], strides = [1, 1]} : vector<32x256xf32> to vector<16x256xf32>
    %15 = tpu.transpose %14, [1, 0] : vector<16x256xf32> -> vector<256x16xf32>
    %cst_12 = arith.constant dense<0.000000e+00> : vector<16x16xf32>
    %16 = tpu.matmul %13, %15, %cst_12 {dimension_numbers = #tpu.dot_dimension_numbers<[1], [0], [0], [1], [0, 0, 1, 1], [], []>} : vector<16x256xf32>, vector<256x16xf32>, vector<16x16xf32> -> vector<16x16xf32>
    %cst_13 = arith.constant dense<0.000000e+00> : vector<16x256xf32>
    %17 = tpu.matmul %12, %5, %cst_13 {dimension_numbers = #tpu.dot_dimension_numbers<[1], [0], [0], [1], [0, 0, 1, 1], [], []>} : vector<16x16xf32>, vector<16x256xf32>, vector<16x256xf32> -> vector<16x256xf32>
    %cst_14 = arith.constant dense<0.000000e+00> : vector<16x256xf32>
    %18 = tpu.matmul %16, %4, %cst_14 {dimension_numbers = #tpu.dot_dimension_numbers<[1], [0], [0], [1], [0, 0, 1, 1], [], []>} : vector<16x16xf32>, vector<16x256xf32>, vector<16x256xf32> -> vector<16x256xf32>
    %19 = tpu.concatenate %17, %18 in 0 : vector<16x256xf32>, vector<16x256xf32> -> vector<32x256xf32>
    %cst_15 = arith.constant dense<0xFF800000> : vector<32xf32>
    %20 = vector.multi_reduction <maximumf>, %19, %cst_15 [1] : vector<32x256xf32> to vector<32xf32>
    %21 = vector.shape_cast %20 : vector<32xf32> to vector<32x1xf32>
    %22 = vector.broadcast %21 : vector<32x1xf32> to vector<32x256xf32>
    %23 = arith.subf %19, %22 : vector<32x256xf32>
    %24 = math.exp %23 : vector<32x256xf32>
    %cst_16 = arith.constant dense<0.000000e+00> : vector<32xf32>
    %25 = vector.multi_reduction <add>, %24, %cst_16 [1] : vector<32x256xf32> to vector<32xf32>
    %26 = vector.shape_cast %25 : vector<32xf32> to vector<32x1xf32>
    %27 = vector.broadcast %26 : vector<32x1xf32> to vector<32x256xf32>
    %28 = arith.divf %24, %27 : vector<32x256xf32>
    %29 = arith.mulf %6, %28 : vector<32x256xf32>
    %c0_17 = arith.constant 0 : index
    %c0_18 = arith.constant 0 : index
    %30 = vector.load %arg5[%c0_17, %c0_18] : memref<64x32xf32, #tpu.memory_space<vmem>>, vector<64x32xf32>
    %cst_19 = arith.constant dense<0.000000e+00> : vector<64x256xf32>
    %31 = tpu.matmul %30, %29, %cst_19 {dimension_numbers = #tpu.dot_dimension_numbers<[1], [0], [0], [1], [0, 0, 1, 1], [], []>} : vector<64x32xf32>, vector<32x256xf32>, vector<64x256xf32> -> vector<64x256xf32>
    %c0_20 = arith.constant 0 : index
    %c0_21 = arith.constant 0 : index
    %32 = vector.load %arg6[%c0_20, %c0_21] : memref<64x1xf32, #tpu.memory_space<vmem>>, vector<64x1xf32>
    %33 = vector.broadcast %32 : vector<64x1xf32> to vector<64x256xf32>
    %34 = arith.addf %31, %33 : vector<64x256xf32>
    %35 = vector.extract_strided_slice %1 {offsets = [0, 0], sizes = [64, 256], strides = [1, 1]} : vector<65x256xf32> to vector<64x256xf32>
    %36 = arith.addf %35, %34 : vector<64x256xf32>
    %c0_22 = arith.constant 0 : index
    %c0_23 = arith.constant 0 : index
    %c0_24 = arith.constant 0 : index
    %37 = vector.load %arg7[%c0_22, %c0_23, %c0_24] : memref<1x64x256xf32, #tpu.memory_space<vmem>>, vector<1x64x256xf32>
    %38 = vector.shape_cast %37 : vector<1x64x256xf32> to vector<64x256xf32>
    %39 = vector.shape_cast %36 : vector<64x256xf32> to vector<1x64x256xf32>
    tpu.vector_store %arg7[%c0_22, %c0_23, %c0_24], %39 {strides = array<i32>} : memref<1x64x256xf32, #tpu.memory_space<vmem>>, vector<1x64x256xf32>,
    return
  }
  func.func @transform_0(%arg0: i32) -> (i32, i32, i32) {
    %c0_i32 = arith.constant 0 : i32
    %c0_i32_0 = arith.constant 0 : i32
    %c0_i32_1 = arith.constant 0 : i32
    return %arg0, %c0_i32, %c0_i32_0 : i32, i32, i32
  }
  func.func @transform_1(%arg0: i32) -> (i32, i32) {
    %c0_i32 = arith.constant 0 : i32
    %c0_i32_0 = arith.constant 0 : i32
    %c0_i32_1 = arith.constant 0 : i32
    return %c0_i32, %c0_i32_0 : i32, i32
  }
  func.func @transform_2(%arg0: i32) -> (i32, i32) {
    %c0_i32 = arith.constant 0 : i32
    %c0_i32_0 = arith.constant 0 : i32
    %c0_i32_1 = arith.constant 0 : i32
    return %c0_i32, %c0_i32_0 : i32, i32
  }
  func.func @transform_3(%arg0: i32) -> (i32, i32) {
    %c0_i32 = arith.constant 0 : i32
    %c0_i32_0 = arith.constant 0 : i32
    %c0_i32_1 = arith.constant 0 : i32
    return %c0_i32, %c0_i32_0 : i32, i32
  }
  func.func @transform_4(%arg0: i32) -> (i32, i32) {
    %c0_i32 = arith.constant 0 : i32
    %c0_i32_0 = arith.constant 0 : i32
    %c0_i32_1 = arith.constant 0 : i32
    return %c0_i32, %c0_i32_0 : i32, i32
  }
  func.func @transform_5(%arg0: i32) -> (i32, i32) {
    %c0_i32 = arith.constant 0 : i32
    %c0_i32_0 = arith.constant 0 : i32
    %c0_i32_1 = arith.constant 0 : i32
    return %c0_i32, %c0_i32_0 : i32, i32
  }
  func.func @transform_6(%arg0: i32) -> (i32, i32, i32) {
    %c0_i32 = arith.constant 0 : i32
    %c0_i32_0 = arith.constant 0 : i32
    %c0_i32_1 = arith.constant 0 : i32
    return %arg0, %c0_i32, %c0_i32_0 : i32, i32, i32
  }
}

</mosaic_0001>

<llo_original>
// kernel: tc_forward.1
$region0: #{tc_forward.1}
  #allocation0 [shape = 'u32[]', space=smem, size = 0x4, offset = 0x4, fixed_abs, tag = 'smem constant byte address 0x4 - core index']
  #allocation1 [shape = 'u32[72,128]{1,0:T(1,128)}', space=vmem, size = 0x9000, scoped, tag = 'internal scratch']
  %s0 = inlined_call_operand.vmem [shape: f32[2,65,256], index: 0, kind: input, shape index: {}]
  %s1 = inlined_call_operand.vmem [shape: f32[16,256], index: 1, kind: input, shape index: {}]
  %s2 = inlined_call_operand.vmem [shape: f32[64,65], index: 2, kind: input, shape index: {}]
  %s3 = inlined_call_operand.vmem [shape: f32[32,65], index: 3, kind: input, shape index: {}]
  %s4 = inlined_call_operand.vmem [shape: f32[64,32], index: 4, kind: input, shape index: {}]
  %s5 = inlined_call_operand.vmem [shape: f32[64,1], index: 5, kind: input, shape index: {}]
  %s6 = inlined_call_operand.vmem [shape: f32[2,64,256], index: 6, kind: output, shape index: {}]
  %s7 = sld [smem:[#allocation0]]
  $region57: #{tc_forward.1} parent=0
    _
  %s9 = ssub.s32 1, %s7
  %s10 = scalar_select 0, %s9, %s7
  loop: start=0, step=1, limit=4
  $region2: #{tc_forward.1} parent=0 // loop_pre_header
    _
  $region3: #{tc_forward.1} parent=0 // loop_header
    %s12 = sphi 0, %s16
    %p13 = scmp.ge.s32.totalorder %s12, 4
    %s22 = sphi 0, %s24
    %s25 = sphi 0, %s22
    %s26 = sphi 0, %s25
    %s42 = sphi 0, %s26
    %s46 = sphi 0, %s46
    %s48 = sphi 0, %s46
    %s49 = sphi 0, %s48
    %s63 = sphi 0, %s49
    %s67 = sphi 0, %s67
    %s69 = sphi 0, %s67
    %s70 = sphi 0, %s69
    %s84 = sphi 0, %s70
    %s88 = sphi 0, %s88
    %s90 = sphi 0, %s88
    %s91 = sphi 0, %s90
    %s105 = sphi 0, %s91
    %s109 = sphi 0, %s109
    %s111 = sphi 0, %s109
    %s112 = sphi 0, %s111
    %s126 = sphi 0, %s112
    %s130 = sphi 0, %s130
    %s132 = sphi 0, %s130
    %s133 = sphi 0, %s132
    %s147 = sphi 0, %s133
    %s153 = sphi 0, %s155
    %s156 = sphi 0, %s153
    %s157 = sphi 0, %s156
    %s173 = sphi 0, %s157
  $region4: #{tc_forward.1} parent=0 // loop_header_branch
    %15 = sbr.rel (%p13) target = $region8
  $region5: #{tc_forward.1} parent=0 // loop_body
    %s17 = ssub.s32 %s12, 1
    %s18 = ssub.s32 %s12, 2
    %s19 = sadd.s32 %s12, 1
    %s20 = ssub.s32 %s12, %s19
    %p21 = scmp.eq.s32.totalorder %s20, 0
    %s23 = sadd.s32 %s22, 1
    %s24 = scalar_select %p21, %s22, %s23
    %p27 = pneg %p21
    %p28 = scmp.eq.s32.totalorder %s12, 1
    %p29 = por %p27, %p28
    %p30 = scmp.ne.s32.totalorder %s22, %s25
    %p31 = scmp.eq.s32.totalorder %s12, 0
    %p32 = por %p30, %p31
    %p33 = scmp.ne.s32.totalorder %s22, %s25
    %p34 = scmp.eq.s32.totalorder %s17, 1
    %p35 = por %p33, %p34
    %p36 = scmp.ne.s32.totalorder %s25, %s26
    %p37 = scmp.eq.s32.totalorder %s17, 0
    %p38 = por %p36, %p37
    %p39 = scmp.ne.s32.totalorder %s25, %s26
    %p40 = scmp.eq.s32.totalorder %s18, 1
    %p41 = por %p39, %p40
    %p43 = scmp.ne.s32.totalorder %s26, %s42
    %p44 = scmp.eq.s32.totalorder %s18, 0
    %p45 = por %p43, %p44
    %s47 = sadd.s32 %s46, 1
    %p50 = scmp.eq.s32.totalorder %s12, 1
    %p51 = scmp.ne.s32.totalorder %s46, %s48
    %p52 = scmp.eq.s32.totalorder %s12, 0
    %p53 = por %p51, %p52
    %p54 = scmp.ne.s32.totalorder %s46, %s48
    %p55 = scmp.eq.s32.totalorder %s17, 1
    %p56 = por %p54, %p55
    %p57 = scmp.ne.s32.totalorder %s48, %s49
    %p58 = scmp.eq.s32.totalorder %s17, 0
    %p59 = por %p57, %p58
    %p60 = scmp.ne.s32.totalorder %s48, %s49
    %p61 = scmp.eq.s32.totalorder %s18, 1
    %p62 = por %p60, %p61
    %p64 = scmp.ne.s32.totalorder %s49, %s63
    %p65 = scmp.eq.s32.totalorder %s18, 0
    %p66 = por %p64, %p65
    %s68 = sadd.s32 %s67, 1
    %p71 = scmp.eq.s32.totalorder %s12, 1
    %p72 = scmp.ne.s32.totalorder %s67, %s69
    %p73 = scmp.eq.s32.totalorder %s12, 0
    %p74 = por %p72, %p73
    %p75 = scmp.ne.s32.totalorder %s67, %s69
    %p76 = scmp.eq.s32.totalorder %s17, 1
    %p77 = por %p75, %p76
    %p78 = scmp.ne.s32.totalorder %s69, %s70
    %p79 = scmp.eq.s32.totalorder %s17, 0
    %p80 = por %p78, %p79
    %p81 = scmp.ne.s32.totalorder %s69, %s70
    %p82 = scmp.eq.s32.totalorder %s18, 1
    %p83 = por %p81, %p82
    %p85 = scmp.ne.s32.totalorder %s70, %s84
    %p86 = scmp.eq.s32.totalorder %s18, 0
    %p87 = por %p85, %p86
    %s89 = sadd.s32 %s88, 1
    %p92 = scmp.eq.s32.totalorder %s12, 1
    %p93 = scmp.ne.s32.totalorder %s88, %s90
    %p94 = scmp.eq.s32.totalorder %s12, 0
    %p95 = por %p93, %p94
    %p96 = scmp.ne.s32.totalorder %s88, %s90
    %p97 = scmp.eq.s32.totalorder %s17, 1
    %p98 = por %p96, %p97
    %p99 = scmp.ne.s32.totalorder %s90, %s91
    %p100 = scmp.eq.s32.totalorder %s17, 0
    %p101 = por %p99, %p100
    %p102 = scmp.ne.s32.totalorder %s90, %s91
    %p103 = scmp.eq.s32.totalorder %s18, 1
    %p104 = por %p102, %p103
    %p106 = scmp.ne.s32.totalorder %s91, %s105
    %p107 = scmp.eq.s32.totalorder %s18, 0
    %p108 = por %p106, %p107
    %s110 = sadd.s32 %s109, 1
    %p113 = scmp.eq.s32.totalorder %s12, 1
    %p114 = scmp.ne.s32.totalorder %s109, %s111
    %p115 = scmp.eq.s32.totalorder %s12, 0
    %p116 = por %p114, %p115
    %p117 = scmp.ne.s32.totalorder %s109, %s111
    %p118 = scmp.eq.s32.totalorder %s17, 1
    %p119 = por %p117, %p118
    %p120 = scmp.ne.s32.totalorder %s111, %s112
    %p121 = scmp.eq.s32.totalorder %s17, 0
    %p122 = por %p120, %p121
    %p123 = scmp.ne.s32.totalorder %s111, %s112
    %p124 = scmp.eq.s32.totalorder %s18, 1
    %p125 = por %p123, %p124
    %p127 = scmp.ne.s32.totalorder %s112, %s126
    %p128 = scmp.eq.s32.totalorder %s18, 0
    %p129 = por %p127, %p128
    %s131 = sadd.s32 %s130, 1
    %p134 = scmp.eq.s32.totalorder %s12, 1
    %p135 = scmp.ne.s32.totalorder %s130, %s132
    %p136 = scmp.eq.s32.totalorder %s12, 0
    %p137 = por %p135, %p136
    %p138 = scmp.ne.s32.totalorder %s130, %s132
    %p139 = scmp.eq.s32.totalorder %s17, 1
    %p140 = por %p138, %p139
    %p141 = scmp.ne.s32.totalorder %s132, %s133
    %p142 = scmp.eq.s32.totalorder %s17, 0
    %p143 = por %p141, %p142
    %p144 = scmp.ne.s32.totalorder %s132, %s133
    %p145 = scmp.eq.s32.totalorder %s18, 1
    %p146 = por %p144, %p145
    %p148 = scmp.ne.s32.totalorder %s133, %s147
    %p149 = scmp.eq.s32.totalorder %s18, 0
    %p150 = por %p148, %p149
    %s151 = ssub.s32 %s12, %s19
    %p152 = scmp.eq.s32.totalorder %s151, 0
    %s154 = sadd.s32 %s153, 1
    %s155 = scalar_select %p152, %s153, %s154
    %p158 = pneg %p152
    %p159 = scmp.eq.s32.totalorder %s12, 1
    %p160 = por %p158, %p159
    %p161 = scmp.ne.s32.totalorder %s153, %s156
    %p162 = scmp.eq.s32.totalorder %s12, 0
    %p163 = por %p161, %p162
    %p164 = scmp.ne.s32.totalorder %s153, %s156
    %p165 = scmp.eq.s32.totalorder %s17, 1
    %p166 = por %p164, %p165
    %p167 = scmp.ne.s32.totalorder %s156, %s157
    %p168 = scmp.eq.s32.totalorder %s17, 0
    %p169 = por %p167, %p168
    %p170 = scmp.ne.s32.totalorder %s156, %s157
    %p171 = scmp.eq.s32.totalorder %s18, 1
    %p172 = por %p170, %p171
    %p174 = scmp.ne.s32.totalorder %s157, %s173
    %p175 = scmp.eq.s32.totalorder %s18, 0
    %p176 = por %p174, %p175
    %p177 = scmp.le.s32.totalorder 1, %s12
    %p178 = scmp.lt.s32.totalorder %s12, 3
    %p179 = pnand %p177, %p178
    %p180 = pneg %p179
    // Predicated region
    $region9: #{tc_forward.1} parent=5 // pred_check
      _
    $region10: #{tc_forward.1} parent=5 // pred_check_branch
      %182 = sbr.rel (%p179) target = $region12
    $region11: #{tc_forward.1} parent=5 // pred_region
      %s183 = ssub.s32 %s12, 1
      // Predicated region
      $region13: #{tc_forward.1} parent=11 // pred_check
        %p184 = pneg %p59
      $region14: #{tc_forward.1} parent=11 // pred_check_branch
        %186 = sbr.rel (%p184) target = $region16
      $region15: #{tc_forward.1} parent=11 // pred_region
        _
      $region16: #{tc_forward.1} parent=11 // pred_fallthru
        _
      // Predicated region
      $region17: #{tc_forward.1} parent=11 // pred_check
        %p187 = pneg %p80
      $region18: #{tc_forward.1} parent=11 // pred_check_branch
        %189 = sbr.rel (%p187) target = $region20
      $region19: #{tc_forward.1} parent=11 // pred_region
        _
      $region20: #{tc_forward.1} parent=11 // pred_fallthru
        _
      // Predicated region
      $region21: #{tc_forward.1} parent=11 // pred_check
        %p190 = pneg %p101
      $region22: #{tc_forward.1} parent=11 // pred_check_branch
        %192 = sbr.rel (%p190) target = $region24
      $region23: #{tc_forward.1} parent=11 // pred_region
        _
      $region24: #{tc_forward.1} parent=11 // pred_fallthru
        _
      // Predicated region
      $region25: #{tc_forward.1} parent=11 // pred_check
        %p193 = pneg %p122
      $region26: #{tc_forward.1} parent=11 // pred_check_branch
        %195 = sbr.rel (%p193) target = $region28
      $region27: #{tc_forward.1} parent=11 // pred_region
        _
      $region28: #{tc_forward.1} parent=11 // pred_fallthru
        _
      // Predicated region
      $region29: #{tc_forward.1} parent=11 // pred_check
        %p196 = pneg %p143
      $region30: #{tc_forward.1} parent=11 // pred_check_branch
        %198 = sbr.rel (%p196) target = $region32
      $region31: #{tc_forward.1} parent=11 // pred_region
        _
      $region32: #{tc_forward.1} parent=11 // pred_fallthru
        _
    $region12: #{tc_forward.1} parent=5 // pred_fallthru
      _
    %p199 = scmp.lt.s32.totalorder %s12, 2
    // Predicated region
    $region33: #{tc_forward.1} parent=5 // pred_check
      %p200 = pneg %p199
    $region34: #{tc_forward.1} parent=5 // pred_check_branch
      %202 = sbr.rel (%p200) target = $region36
    $region35: #{tc_forward.1} parent=5 // pred_region
      // Predicated region
      $region37: #{tc_forward.1} parent=35 // pred_check
        %p203 = pneg %p32
      $region38: #{tc_forward.1} parent=35 // pred_check_branch
        %205 = sbr.rel (%p203) target = $region40
      $region39: #{tc_forward.1} parent=35 // pred_region
        %p206 = scmp.lt.s32.totalorder %s12, 1
        %s207 = scalar_select %p206, %s12, 1
        %s208 = smul.addr %s207, 18
        %s209 = smul.addr %s208, 8
        %s210 = scalar_lea.vmem %s0, %s209
      $region40: #{tc_forward.1} parent=35 // pred_fallthru
        _
    $region36: #{tc_forward.1} parent=5 // pred_fallthru
      _
    %p211 = scmp.le.s32.totalorder 1, %s12
    %p212 = scmp.lt.s32.totalorder %s12, 3
    %p213 = pnand %p211, %p212
    %p214 = pneg %p213
    // Predicated region
    $region41: #{tc_forward.1} parent=5 // pred_check
      _
    $region42: #{tc_forward.1} parent=5 // pred_check_branch
      %216 = sbr.rel (%p213) target = $region44
    $region43: #{tc_forward.1} parent=5 // pred_region
      %s217 = ssub.s32 %s12, 1
      %p218 = scmp.lt.s32.totalorder %s17, 1
      %s219 = scalar_select %p218, %s17, 1
      %s220 = smul.addr %s219, 18
      %s221 = smul.addr %s220, 8
      %s222 = scalar_lea.vmem %s0, %s221
      %p223 = pneg %p38
      %p224 = pneg %p35
      %p225 = pneg %p59
      %p226 = pneg %p56
      %p227 = pneg %p80
      %p228 = pneg %p77
      %p229 = pneg %p101
      %p230 = pneg %p98
      %p231 = pneg %p122
      %p232 = pneg %p119
      %p233 = pneg %p143
      %p234 = pneg %p140
      %p235 = pneg %p169
      %p236 = pneg %p166
      %p237 = scmp.lt.s32.totalorder %s17, 1
      %s238 = scalar_select %p237, %s17, 1
      %s239 = smul.addr %s238, 16
      %s240 = smul.addr %s239, 8
      %s241 = scalar_lea.vmem %s6, %s240
      %p242 = scmp.lt.s32.totalorder %s17, 1
      %s243 = scalar_select %p242, %s17, 1
      %s244 = smul.addr %s243, 18
      %s245 = smul.addr %s244, 8
      %s246 = scalar_lea.vmem %s0, %s245
      %p247 = scmp.lt.s32.totalorder %s17, 1
      %s248 = scalar_select %p247, %s17, 1
      %s249 = smul.addr %s248, 16
      %s250 = smul.addr %s249, 8
      %s251 = scalar_lea.vmem %s6, %s250
      %v252 = vld [vmem:[%s246] sm:$0xff]
      %v253 = vld [vmem:[%s246 + $0x8] sm:$0xff]
      %v254 = vld [vmem:[%s246 + $0x10] sm:$0xff]
      %v255 = vld [vmem:[%s246 + $0x18] sm:$0xff]
      %v256 = vld [vmem:[%s246 + $0x20] sm:$0xff]
      %v257 = vld [vmem:[%s246 + $0x28] sm:$0xff]
      %v258 = vld [vmem:[%s246 + $0x30] sm:$0xff]
      %v259 = vld [vmem:[%s246 + $0x38] sm:$0xff]
      %v260 = vld [vmem:[%s246 + $0x40] sm:$0xff]
      %v261 = vld [vmem:[%s246 + $0x48] sm:$0xff]
      %v262 = vld [vmem:[%s246 + $0x50] sm:$0xff]
      %v263 = vld [vmem:[%s246 + $0x58] sm:$0xff]
      %v264 = vld [vmem:[%s246 + $0x60] sm:$0xff]
      %v265 = vld [vmem:[%s246 + $0x68] sm:$0xff]
      %v266 = vld [vmem:[%s246 + $0x70] sm:$0xff]
      %v267 = vld [vmem:[%s246 + $0x78] sm:$0xff]
      %v268 = vld [vmem:[%s246 + $0x80] sm:$0x1]
      %v269 = vld [vmem:[%s246 + $0x88] sm:$0x1]
      %v270 = vld [vmem:[%s2] sm:$0xff]
      %v271 = vld [vmem:[%s2 + $0x8] sm:$0xff]
      %v272 = vld [vmem:[%s2 + $0x10] sm:$0xff]
      %v273 = vld [vmem:[%s2 + $0x18] sm:$0xff]
      %v274 = vld [vmem:[%s2 + $0x20] sm:$0xff]
      %v275 = vld [vmem:[%s2 + $0x28] sm:$0xff]
      %v276 = vld [vmem:[%s2 + $0x30] sm:$0xff]
      %v277 = vld [vmem:[%s2 + $0x38] sm:$0xff]
      %vm278 = vcmask 531456
      %v280 = vsel %vm278, %v270, 0
      %v283 = vsel %vm278, %v271, 0
      %v286 = vsel %vm278, %v272, 0
      %v289 = vsel %vm278, %v273, 0
      %v292 = vsel %vm278, %v274, 0
      %v295 = vsel %vm278, %v275, 0
      %v298 = vsel %vm278, %v276, 0
      %v301 = vsel %vm278, %v277, 0
      %vm303 = vcmask 1040384
      %v305 = vsel %vm303, %v268, 0
      %v308 = vsel %vm303, %v269, 0
      %310 = vmatpush.msra.mxu0 0.0
      %311 = vmatpush.msra.mxu0 0.0
      %312 = vmatpush.msra.mxu0 0.0
      %313 = vmatpush.msra.mxu0 0.0
      %314 = vmatpush.msra.mxu0 0.0
      %315 = vmatpush.msra.mxu0 0.0
      %316 = vmatpush.msra.mxu0 0.0
      %317 = vmatpush.msra.mxu0 %v305
      %318 = vmatpush.msra.mxu0 %v266
      %319 = vmatpush.msra.mxu0 %v264
      %320 = vmatpush.msra.mxu0 %v262
      %321 = vmatpush.msra.mxu0 %v260
      %322 = vmatpush.msra.mxu0 %v258
      %323 = vmatpush.msra.mxu0 %v256
      %324 = vmatpush.msra.mxu0 %v254
      %325 = vmatpush.msra.mxu0 %v252
      %326 = vmatmul.f32.gmra.mxu0 %v280
      %v327 = vpop.f32.mrf.mxu0
      %v328 = vadd.f32 0.0, %v327
      %329 = vmatmul.f32.gmra.mxu0 %v283
      %v330 = vpop.f32.mrf.mxu0
      %v331 = vadd.f32 0.0, %v330
      %332 = vmatmul.f32.gmra.mxu0 %v286
      %v333 = vpop.f32.mrf.mxu0
      %v334 = vadd.f32 0.0, %v333
      %335 = vmatmul.f32.gmra.mxu0 %v289
      %v336 = vpop.f32.mrf.mxu0
      %v337 = vadd.f32 0.0, %v336
      %338 = vmatmul.f32.gmra.mxu0 %v292
      %v339 = vpop.f32.mrf.mxu0
      %v340 = vadd.f32 0.0, %v339
      %341 = vmatmul.f32.gmra.mxu0 %v295
      %v342 = vpop.f32.mrf.mxu0
      %v343 = vadd.f32 0.0, %v342
      %344 = vmatmul.f32.gmra.mxu0 %v298
      %v345 = vpop.f32.mrf.mxu0
      %v346 = vadd.f32 0.0, %v345
      %347 = vmatmul.f32.gmra.mxu0 %v301
      %v348 = vpop.f32.mrf.mxu0
      %v349 = vadd.f32 0.0, %v348
      %350 = vdwg.mxu0
      %351 = vmatpush.msra.mxu0 0.0
      %352 = vmatpush.msra.mxu0 0.0
      %353 = vmatpush.msra.mxu0 0.0
      %354 = vmatpush.msra.mxu0 0.0
      %355 = vmatpush.msra.mxu0 0.0
      %356 = vmatpush.msra.mxu0 0.0
      %357 = vmatpush.msra.mxu0 0.0
      %358 = vmatpush.msra.mxu0 %v308
      %359 = vmatpush.msra.mxu0 %v267
      %360 = vmatpush.msra.mxu0 %v265
      %361 = vmatpush.msra.mxu0 %v263
      %362 = vmatpush.msra.mxu0 %v261
      %363 = vmatpush.msra.mxu0 %v259
      %364 = vmatpush.msra.mxu0 %v257
      %365 = vmatpush.msra.mxu0 %v255
      %366 = vmatpush.msra.mxu0 %v253
      %367 = vmatmul.f32.gmra.mxu0 %v280
      %v368 = vpop.f32.mrf.mxu0
      %v369 = vadd.f32 0.0, %v368
      %370 = vmatmul.f32.gmra.mxu0 %v283
      %v371 = vpop.f32.mrf.mxu0
      %v372 = vadd.f32 0.0, %v371
      %373 = vmatmul.f32.gmra.mxu0 %v286
      %v374 = vpop.f32.mrf.mxu0
      %v375 = vadd.f32 0.0, %v374
      %376 = vmatmul.f32.gmra.mxu0 %v289
      %v377 = vpop.f32.mrf.mxu0
      %v378 = vadd.f32 0.0, %v377
      %379 = vmatmul.f32.gmra.mxu0 %v292
      %v380 = vpop.f32.mrf.mxu0
      %v381 = vadd.f32 0.0, %v380
      %382 = vmatmul.f32.gmra.mxu0 %v295
      %v383 = vpop.f32.mrf.mxu0
      %v384 = vadd.f32 0.0, %v383
      %385 = vmatmul.f32.gmra.mxu0 %v298
      %v386 = vpop.f32.mrf.mxu0
      %v387 = vadd.f32 0.0, %v386
      %388 = vmatmul.f32.gmra.mxu0 %v301
      %v389 = vpop.f32.mrf.mxu0
      %v390 = vadd.f32 0.0, %v389
      %391 = vdwg.mxu0
      %v392 = vld [vmem:[%s3] sm:$0xff]
      %v393 = vld [vmem:[%s3 + $0x8] sm:$0xff]
      %v394 = vld [vmem:[%s3 + $0x10] sm:$0xff]
      %v395 = vld [vmem:[%s3 + $0x18] sm:$0xff]
      %v397 = vsel %vm278, %v392, 0
      %v400 = vsel %vm278, %v393, 0
      %v403 = vsel %vm278, %v394, 0
      %v406 = vsel %vm278, %v395, 0
      %408 = vmatpush.msra.mxu0 0.0
      %409 = vmatpush.msra.mxu0 0.0
      %410 = vmatpush.msra.mxu0 0.0
      %411 = vmatpush.msra.mxu0 0.0
      %412 = vmatpush.msra.mxu0 0.0
      %413 = vmatpush.msra.mxu0 0.0
      %414 = vmatpush.msra.mxu0 0.0
      %415 = vmatpush.msra.mxu0 %v305
      %416 = vmatpush.msra.mxu0 %v266
      %417 = vmatpush.msra.mxu0 %v264
      %418 = vmatpush.msra.mxu0 %v262
      %419 = vmatpush.msra.mxu0 %v260
      %420 = vmatpush.msra.mxu0 %v258
      %421 = vmatpush.msra.mxu0 %v256
      %422 = vmatpush.msra.mxu0 %v254
      %423 = vmatpush.msra.mxu0 %v252
      %424 = vmatmul.f32.gmra.mxu0 %v397
      %v425 = vpop.f32.mrf.mxu0
      %v426 = vadd.f32 0.0, %v425
      %427 = vmatmul.f32.gmra.mxu0 %v400
      %v428 = vpop.f32.mrf.mxu0
      %v429 = vadd.f32 0.0, %v428
      %430 = vmatmul.f32.gmra.mxu0 %v403
      %v431 = vpop.f32.mrf.mxu0
      %v432 = vadd.f32 0.0, %v431
      %433 = vmatmul.f32.gmra.mxu0 %v406
      %v434 = vpop.f32.mrf.mxu0
      %v435 = vadd.f32 0.0, %v434
      %436 = vdwg.mxu0
      %437 = vmatpush.msra.mxu0 0.0
      %438 = vmatpush.msra.mxu0 0.0
      %439 = vmatpush.msra.mxu0 0.0
      %440 = vmatpush.msra.mxu0 0.0
      %441 = vmatpush.msra.mxu0 0.0
      %442 = vmatpush.msra.mxu0 0.0
      %443 = vmatpush.msra.mxu0 0.0
      %444 = vmatpush.msra.mxu0 %v308
      %445 = vmatpush.msra.mxu0 %v267
      %446 = vmatpush.msra.mxu0 %v265
      %447 = vmatpush.msra.mxu0 %v263
      %448 = vmatpush.msra.mxu0 %v261
      %449 = vmatpush.msra.mxu0 %v259
      %450 = vmatpush.msra.mxu0 %v257
      %451 = vmatpush.msra.mxu0 %v255
      %452 = vmatpush.msra.mxu0 %v253
      %453 = vmatmul.f32.gmra.mxu0 %v397
      %v454 = vpop.f32.mrf.mxu0
      %v455 = vadd.f32 0.0, %v454
      %456 = vmatmul.f32.gmra.mxu0 %v400
      %v457 = vpop.f32.mrf.mxu0
      %v458 = vadd.f32 0.0, %v457
      %459 = vmatmul.f32.gmra.mxu0 %v403
      %v460 = vpop.f32.mrf.mxu0
      %v461 = vadd.f32 0.0, %v460
      %462 = vmatmul.f32.gmra.mxu0 %v406
      %v463 = vpop.f32.mrf.mxu0
      %v464 = vadd.f32 0.0, %v463
      %465 = vdwg.mxu0
      %v466 = vld [vmem:[%s1] sm:$0xff]
      %v467 = vld [vmem:[%s1 + $0x8] sm:$0xff]
      %v468 = vld [vmem:[%s1 + $0x10] sm:$0xff]
      %v469 = vld [vmem:[%s1 + $0x18] sm:$0xff]
      %470 = vmatpush.xpose.msra.mxu0 0.0
      %471 = vmatpush.xpose.msra.mxu0 0.0
      %472 = vmatpush.xpose.msra.mxu0 0.0
      %473 = vmatpush.xpose.msra.mxu0 0.0
      %474 = vmatpush.xpose.msra.mxu0 0.0
      %475 = vmatpush.xpose.msra.mxu0 0.0
      %476 = vmatpush.xpose.msra.mxu0 0.0
      %477 = vmatpush.xpose.msra.mxu0 0.0
      %478 = vmatpush.xpose.msra.mxu0 0.0
      %479 = vmatpush.xpose.msra.mxu0 0.0
      %480 = vmatpush.xpose.msra.mxu0 0.0
      %481 = vmatpush.xpose.msra.mxu0 0.0
      %482 = vmatpush.xpose.msra.mxu0 0.0
      %483 = vmatpush.xpose.msra.mxu0 0.0
      %484 = vmatpush.xpose.msra.mxu0 %v429
      %485 = vmatpush.xpose.msra.mxu0 %v426
      %486 = vmatmul.f32.gmra.mxu0 %v466
      %v487 = vpop.f32.mrf.mxu0
      %v488 = vadd.f32 0.0, %v487
      %489 = vmatmul.f32.gmra.mxu0 %v468
      %v490 = vpop.f32.mrf.mxu0
      %v491 = vadd.f32 0.0, %v490
      %492 = vdwg.mxu0
      %493 = vmatpush.xpose.msra.mxu0 0.0
      %494 = vmatpush.xpose.msra.mxu0 0.0
      %495 = vmatpush.xpose.msra.mxu0 0.0
      %496 = vmatpush.xpose.msra.mxu0 0.0
      %497 = vmatpush.xpose.msra.mxu0 0.0
      %498 = vmatpush.xpose.msra.mxu0 0.0
      %499 = vmatpush.xpose.msra.mxu0 0.0
      %500 = vmatpush.xpose.msra.mxu0 0.0
      %501 = vmatpush.xpose.msra.mxu0 0.0
      %502 = vmatpush.xpose.msra.mxu0 0.0
      %503 = vmatpush.xpose.msra.mxu0 0.0
      %504 = vmatpush.xpose.msra.mxu0 0.0
      %505 = vmatpush.xpose.msra.mxu0 0.0
      %506 = vmatpush.xpose.msra.mxu0 0.0
      %507 = vmatpush.xpose.msra.mxu0 %v458
      %508 = vmatpush.xpose.msra.mxu0 %v455
      %509 = vmatmul.f32.gmra.mxu0 %v467
      %v510 = vpop.f32.mrf.mxu0
      %v511 = vadd.f32 %v488, %v510
      %512 = vmatmul.f32.gmra.mxu0 %v469
      %v513 = vpop.f32.mrf.mxu0
      %v514 = vadd.f32 %v491, %v513
      %515 = vdwg.mxu0
      %516 = vmatpush.xpose.msra.mxu0 0.0
      %517 = vmatpush.xpose.msra.mxu0 0.0
      %518 = vmatpush.xpose.msra.mxu0 0.0
      %519 = vmatpush.xpose.msra.mxu0 0.0
      %520 = vmatpush.xpose.msra.mxu0 0.0
      %521 = vmatpush.xpose.msra.mxu0 0.0
      %522 = vmatpush.xpose.msra.mxu0 0.0
      %523 = vmatpush.xpose.msra.mxu0 0.0
      %524 = vmatpush.xpose.msra.mxu0 0.0
      %525 = vmatpush.xpose.msra.mxu0 0.0
      %526 = vmatpush.xpose.msra.mxu0 0.0
      %527 = vmatpush.xpose.msra.mxu0 0.0
      %528 = vmatpush.xpose.msra.mxu0 0.0
      %529 = vmatpush.xpose.msra.mxu0 0.0
      %530 = vmatpush.xpose.msra.mxu0 %v435
      %531 = vmatpush.xpose.msra.mxu0 %v432
      %532 = vmatmul.f32.gmra.mxu0 %v466
      %v533 = vpop.f32.mrf.mxu0
      %v534 = vadd.f32 0.0, %v533
      %535 = vmatmul.f32.gmra.mxu0 %v468
      %v536 = vpop.f32.mrf.mxu0
      %v537 = vadd.f32 0.0, %v536
      %538 = vdwg.mxu0
      %539 = vmatpush.xpose.msra.mxu0 0.0
      %540 = vmatpush.xpose.msra.mxu0 0.0
      %541 = vmatpush.xpose.msra.mxu0 0.0
      %542 = vmatpush.xpose.msra.mxu0 0.0
      %543 = vmatpush.xpose.msra.mxu0 0.0
      %544 = vmatpush.xpose.msra.mxu0 0.0
      %545 = vmatpush.xpose.msra.mxu0 0.0
      %546 = vmatpush.xpose.msra.mxu0 0.0
      %547 = vmatpush.xpose.msra.mxu0 0.0
      %548 = vmatpush.xpose.msra.mxu0 0.0
      %549 = vmatpush.xpose.msra.mxu0 0.0
      %550 = vmatpush.xpose.msra.mxu0 0.0
      %551 = vmatpush.xpose.msra.mxu0 0.0
      %552 = vmatpush.xpose.msra.mxu0 0.0
      %553 = vmatpush.xpose.msra.mxu0 %v464
      %554 = vmatpush.xpose.msra.mxu0 %v461
      %555 = vmatmul.f32.gmra.mxu0 %v467
      %v556 = vpop.f32.mrf.mxu0
      %v557 = vadd.f32 %v534, %v556
      %558 = vmatmul.f32.gmra.mxu0 %v469
      %v559 = vpop.f32.mrf.mxu0
      %v560 = vadd.f32 %v537, %v559
      %561 = vdwg.mxu0
      %vm562 = vcmask 130048
      %v564 = vsel %vm562, %v511, 0
      %v567 = vsel %vm562, %v514, 0
      %569 = vmatpush.msra.mxu0 0.0
      %570 = vmatpush.msra.mxu0 0.0
      %571 = vmatpush.msra.mxu0 0.0
      %572 = vmatpush.msra.mxu0 0.0
      %573 = vmatpush.msra.mxu0 0.0
      %574 = vmatpush.msra.mxu0 0.0
      %575 = vmatpush.msra.mxu0 0.0
      %576 = vmatpush.msra.mxu0 0.0
      %577 = vmatpush.msra.mxu0 0.0
      %578 = vmatpush.msra.mxu0 0.0
      %579 = vmatpush.msra.mxu0 0.0
      %580 = vmatpush.msra.mxu0 0.0
      %581 = vmatpush.msra.mxu0 0.0
      %582 = vmatpush.msra.mxu0 0.0
      %583 = vmatpush.msra.mxu0 %v337
      %584 = vmatpush.msra.mxu0 %v334
      %585 = vmatmul.f32.gmra.mxu0 %v564
      %v586 = vpop.f32.mrf.mxu0
      %v587 = vadd.f32 0.0, %v586
      %588 = vmatmul.f32.gmra.mxu0 %v567
      %v589 = vpop.f32.mrf.mxu0
      %v590 = vadd.f32 0.0, %v589
      %591 = vdwg.mxu0
      %592 = vmatpush.msra.mxu0 0.0
      %593 = vmatpush.msra.mxu0 0.0
      %594 = vmatpush.msra.mxu0 0.0
      %595 = vmatpush.msra.mxu0 0.0
      %596 = vmatpush.msra.mxu0 0.0
      %597 = vmatpush.msra.mxu0 0.0
      %598 = vmatpush.msra.mxu0 0.0
      %599 = vmatpush.msra.mxu0 0.0
      %600 = vmatpush.msra.mxu0 0.0
      %601 = vmatpush.msra.mxu0 0.0
      %602 = vmatpush.msra.mxu0 0.0
      %603 = vmatpush.msra.mxu0 0.0
      %604 = vmatpush.msra.mxu0 0.0
      %605 = vmatpush.msra.mxu0 0.0
      %606 = vmatpush.msra.mxu0 %v378
      %607 = vmatpush.msra.mxu0 %v375
      %608 = vmatmul.f32.gmra.mxu0 %v564
      %v609 = vpop.f32.mrf.mxu0
      %v610 = vadd.f32 0.0, %v609
      %611 = vmatmul.f32.gmra.mxu0 %v567
      %v612 = vpop.f32.mrf.mxu0
      %v613 = vadd.f32 0.0, %v612
      %614 = vdwg.mxu0
      %v616 = vsel %vm562, %v557, 0
      %v619 = vsel %vm562, %v560, 0
      %621 = vmatpush.msra.mxu0 0.0
      %622 = vmatpush.msra.mxu0 0.0
      %623 = vmatpush.msra.mxu0 0.0
      %624 = vmatpush.msra.mxu0 0.0
      %625 = vmatpush.msra.mxu0 0.0
      %626 = vmatpush.msra.mxu0 0.0
      %627 = vmatpush.msra.mxu0 0.0
      %628 = vmatpush.msra.mxu0 0.0
      %629 = vmatpush.msra.mxu0 0.0
      %630 = vmatpush.msra.mxu0 0.0
      %631 = vmatpush.msra.mxu0 0.0
      %632 = vmatpush.msra.mxu0 0.0
      %633 = vmatpush.msra.mxu0 0.0
      %634 = vmatpush.msra.mxu0 0.0
      %635 = vmatpush.msra.mxu0 %v331
      %636 = vmatpush.msra.mxu0 %v328
      %637 = vmatmul.f32.gmra.mxu0 %v616
      %v638 = vpop.f32.mrf.mxu0
      %v639 = vadd.f32 0.0, %v638
      %640 = vmatmul.f32.gmra.mxu0 %v619
      %v641 = vpop.f32.mrf.mxu0
      %v642 = vadd.f32 0.0, %v641
      %643 = vdwg.mxu0
      %644 = vmatpush.msra.mxu0 0.0
      %645 = vmatpush.msra.mxu0 0.0
      %646 = vmatpush.msra.mxu0 0.0
      %647 = vmatpush.msra.mxu0 0.0
      %648 = vmatpush.msra.mxu0 0.0
      %649 = vmatpush.msra.mxu0 0.0
      %650 = vmatpush.msra.mxu0 0.0
      %651 = vmatpush.msra.mxu0 0.0
      %652 = vmatpush.msra.mxu0 0.0
      %653 = vmatpush.msra.mxu0 0.0
      %654 = vmatpush.msra.mxu0 0.0
      %655 = vmatpush.msra.mxu0 0.0
      %656 = vmatpush.msra.mxu0 0.0
      %657 = vmatpush.msra.mxu0 0.0
      %658 = vmatpush.msra.mxu0 %v372
      %659 = vmatpush.msra.mxu0 %v369
      %660 = vmatmul.f32.gmra.mxu0 %v616
      %v661 = vpop.f32.mrf.mxu0
      %v662 = vadd.f32 0.0, %v661
      %663 = vmatmul.f32.gmra.mxu0 %v619
      %v664 = vpop.f32.mrf.mxu0
      %v665 = vadd.f32 0.0, %v664
      %666 = vdwg.mxu0
      %v667 = vmax.f32 %v587, %v610
      %668 = vmax.xlane.f32.xlu0 %v667
      %v669 = vpop.xlane.xlu0 %668
      %v670 = vmax.f32 %v590, %v613
      %671 = vmax.xlane.f32.xlu0 %v670
      %v672 = vpop.xlane.xlu0 %671
      %v673 = vmax.f32 %v639, %v662
      %674 = vmax.xlane.f32.xlu0 %v673
      %v675 = vpop.xlane.xlu0 %674
      %v676 = vmax.f32 %v642, %v665
      %677 = vmax.xlane.f32.xlu0 %v676
      %v678 = vpop.xlane.xlu0 %677
      %v679 = vsub.f32 %v587, %v669
      %v680 = vsub.f32 %v610, %v669
      %v681 = vsub.f32 %v590, %v672
      %v682 = vsub.f32 %v613, %v672
      %v683 = vsub.f32 %v639, %v675
      %v684 = vsub.f32 %v662, %v675
      %v685 = vsub.f32 %v642, %v678
      %v686 = vsub.f32 %v665, %v678
      %v687 = vmul.f32 %v679, 1.442695
      %v688 = vpow.pop %v687
      %v689 = vmul.f32 %v680, 1.442695
      %v690 = vpow.pop %v689
      %v691 = vmul.f32 %v681, 1.442695
      %v692 = vpow.pop %v691
      %v693 = vmul.f32 %v682, 1.442695
      %v694 = vpow.pop %v693
      %v695 = vmul.f32 %v683, 1.442695
      %v696 = vpow.pop %v695
      %v697 = vmul.f32 %v684, 1.442695
      %v698 = vpow.pop %v697
      %v699 = vmul.f32 %v685, 1.442695
      %v700 = vpow.pop %v699
      %v701 = vmul.f32 %v686, 1.442695
      %v702 = vpow.pop %v701
      %v703 = vadd.f32 %v688, %v690
      %704 = vadd.xlane.f32.xlu0 %v703
      %v705 = vpop.xlane.xlu0 %704
      %v706 = vadd.f32 %v692, %v694
      %707 = vadd.xlane.f32.xlu0 %v706
      %v708 = vpop.xlane.xlu0 %707
      %v709 = vadd.f32 %v696, %v698
      %710 = vadd.xlane.f32.xlu0 %v709
      %v711 = vpop.xlane.xlu0 %710
      %v712 = vadd.f32 %v700, %v702
      %713 = vadd.xlane.f32.xlu0 %v712
      %v714 = vpop.xlane.xlu0 %713
      %v715 = vrcp.pop %v705
      %v716 = vmul.f32 %v705, %v715
      %v717 = vsub.f32 1.0, %v716
      %v718 = vmul.f32 %v715, %v717
      %v719 = vadd.f32 %v715, %v718
      %vm720 = vweird.f32 %v705
      %vm721 = vweird.f32 %v715
      %vm722 = vmor %vm720, %vm721
      %v723 = vsel %vm722, %v715, %v719
      %v724 = vand.u32 2147483647, %v705
      %vm725 = vcmp.eq.f32.partialorder %v724, 8.507059e+37
      %v726 = vand.u32 %v705, 2147483648
      %v727 = vor.u32 1.1754944e-38, %v726
      %v728 = vsel %vm725, %v727, %v723
      %v729 = vmul.f32 %v688, %v728
      %v730 = vmul.f32 %v690, %v728
      %v731 = vrcp.pop %v708
      %v732 = vmul.f32 %v708, %v731
      %v733 = vsub.f32 1.0, %v732
      %v734 = vmul.f32 %v731, %v733
      %v735 = vadd.f32 %v731, %v734
      %vm736 = vweird.f32 %v708
      %vm737 = vweird.f32 %v731
      %vm738 = vmor %vm736, %vm737
      %v739 = vsel %vm738, %v731, %v735
      %v740 = vand.u32 2147483647, %v708
      %vm741 = vcmp.eq.f32.partialorder %v740, 8.507059e+37
      %v742 = vand.u32 %v708, 2147483648
      %v743 = vor.u32 1.1754944e-38, %v742
      %v744 = vsel %vm741, %v743, %v739
      %v745 = vmul.f32 %v692, %v744
      %v746 = vmul.f32 %v694, %v744
      %v747 = vrcp.pop %v711
      %v748 = vmul.f32 %v711, %v747
      %v749 = vsub.f32 1.0, %v748
      %v750 = vmul.f32 %v747, %v749
      %v751 = vadd.f32 %v747, %v750
      %vm752 = vweird.f32 %v711
      %vm753 = vweird.f32 %v747
      %vm754 = vmor %vm752, %vm753
      %v755 = vsel %vm754, %v747, %v751
      %v756 = vand.u32 2147483647, %v711
      %vm757 = vcmp.eq.f32.partialorder %v756, 8.507059e+37
      %v758 = vand.u32 %v711, 2147483648
      %v759 = vor.u32 1.1754944e-38, %v758
      %v760 = vsel %vm757, %v759, %v755
      %v761 = vmul.f32 %v696, %v760
      %v762 = vmul.f32 %v698, %v760
      %v763 = vrcp.pop %v714
      %v764 = vmul.f32 %v714, %v763
      %v765 = vsub.f32 1.0, %v764
      %v766 = vmul.f32 %v763, %v765
      %v767 = vadd.f32 %v763, %v766
      %vm768 = vweird.f32 %v714
      %vm769 = vweird.f32 %v763
      %vm770 = vmor %vm768, %vm769
      %v771 = vsel %vm770, %v763, %v767
      %v772 = vand.u32 2147483647, %v714
      %vm773 = vcmp.eq.f32.partialorder %v772, 8.507059e+37
      %v774 = vand.u32 %v714, 2147483648
      %v775 = vor.u32 1.1754944e-38, %v774
      %v776 = vsel %vm773, %v775, %v771
      %v777 = vmul.f32 %v700, %v776
      %v778 = vmul.f32 %v702, %v776
      %v779 = vmul.f32 %v340, %v729
      %v780 = vmul.f32 %v381, %v730
      %v781 = vmul.f32 %v343, %v745
      %v782 = vmul.f32 %v384, %v746
      %v783 = vmul.f32 %v346, %v761
      %v784 = vmul.f32 %v387, %v762
      %v785 = vmul.f32 %v349, %v777
      %v786 = vmul.f32 %v390, %v778
      %v787 = vld [vmem:[%s4] sm:$0xff]
      %v788 = vld [vmem:[%s4 + $0x8] sm:$0xff]
      %v789 = vld [vmem:[%s4 + $0x10] sm:$0xff]
      %v790 = vld [vmem:[%s4 + $0x18] sm:$0xff]
      %v791 = vld [vmem:[%s4 + $0x20] sm:$0xff]
      %v792 = vld [vmem:[%s4 + $0x28] sm:$0xff]
      %v793 = vld [vmem:[%s4 + $0x30] sm:$0xff]
      %v794 = vld [vmem:[%s4 + $0x38] sm:$0xff]
      %v795 = vld [vmem:[%s5] sm:$0xff]
      %v796 = vld [vmem:[%s5 + $0x8] sm:$0xff]
      %v797 = vld [vmem:[%s5 + $0x10] sm:$0xff]
      %v798 = vld [vmem:[%s5 + $0x18] sm:$0xff]
      %v799 = vld [vmem:[%s5 + $0x20] sm:$0xff]
      %v800 = vld [vmem:[%s5 + $0x28] sm:$0xff]
      %v801 = vld [vmem:[%s5 + $0x30] sm:$0xff]
      %v802 = vld [vmem:[%s5 + $0x38] sm:$0xff]
      %804 = vset.pattern.permute.xlu0 0
      %805 = vperm.xlu0 %804, %v795
      %v806 = vpop.permute.xlu0 %805
      %809 = vset.pattern.permute.xlu0 0
      %810 = vperm.xlu0 %809, %v796
      %v811 = vpop.permute.xlu0 %810
      %814 = vset.pattern.permute.xlu0 0
      %815 = vperm.xlu0 %814, %v797
      %v816 = vpop.permute.xlu0 %815
      %819 = vset.pattern.permute.xlu0 0
      %820 = vperm.xlu0 %819, %v798
      %v821 = vpop.permute.xlu0 %820
      %824 = vset.pattern.permute.xlu0 0
      %825 = vperm.xlu0 %824, %v799
      %v826 = vpop.permute.xlu0 %825
      %829 = vset.pattern.permute.xlu0 0
      %830 = vperm.xlu0 %829, %v800
      %v831 = vpop.permute.xlu0 %830
      %834 = vset.pattern.permute.xlu0 0
      %835 = vperm.xlu0 %834, %v801
      %v836 = vpop.permute.xlu0 %835
      %839 = vset.pattern.permute.xlu0 0
      %840 = vperm.xlu0 %839, %v802
      %v841 = vpop.permute.xlu0 %840
      %vm843 = vcmask 261120
      %v845 = vsel %vm843, %v787, 0
      %v848 = vsel %vm843, %v788, 0
      %v851 = vsel %vm843, %v789, 0
      %v854 = vsel %vm843, %v790, 0
      %v857 = vsel %vm843, %v791, 0
      %v860 = vsel %vm843, %v792, 0
      %v863 = vsel %vm843, %v793, 0
      %v866 = vsel %vm843, %v794, 0
      %868 = vmatpush.msra.mxu0 0.0
      %869 = vmatpush.msra.mxu0 0.0
      %870 = vmatpush.msra.mxu0 0.0
      %871 = vmatpush.msra.mxu0 0.0
      %872 = vmatpush.msra.mxu0 0.0
      %873 = vmatpush.msra.mxu0 0.0
      %874 = vmatpush.msra.mxu0 0.0
      %875 = vmatpush.msra.mxu0 0.0
      %876 = vmatpush.msra.mxu0 0.0
      %877 = vmatpush.msra.mxu0 0.0
      %878 = vmatpush.msra.mxu0 0.0
      %879 = vmatpush.msra.mxu0 0.0
      %880 = vmatpush.msra.mxu0 %v785
      %881 = vmatpush.msra.mxu0 %v783
      %882 = vmatpush.msra.mxu0 %v781
      %883 = vmatpush.msra.mxu0 %v779
      %884 = vmatmul.f32.gmra.mxu0 %v845
      %v885 = vpop.f32.mrf.mxu0
      %v886 = vadd.f32 %v806, %v885
      %887 = vmatmul.f32.gmra.mxu0 %v848
      %v888 = vpop.f32.mrf.mxu0
      %v889 = vadd.f32 %v811, %v888
      %890 = vmatmul.f32.gmra.mxu0 %v851
      %v891 = vpop.f32.mrf.mxu0
      %v892 = vadd.f32 %v816, %v891
      %893 = vmatmul.f32.gmra.mxu0 %v854
      %v894 = vpop.f32.mrf.mxu0
      %v895 = vadd.f32 %v821, %v894
      %896 = vmatmul.f32.gmra.mxu0 %v857
      %v897 = vpop.f32.mrf.mxu0
      %v898 = vadd.f32 %v826, %v897
      %899 = vmatmul.f32.gmra.mxu0 %v860
      %v900 = vpop.f32.mrf.mxu0
      %v901 = vadd.f32 %v831, %v900
      %902 = vmatmul.f32.gmra.mxu0 %v863
      %v903 = vpop.f32.mrf.mxu0
      %v904 = vadd.f32 %v836, %v903
      %905 = vmatmul.f32.gmra.mxu0 %v866
      %v906 = vpop.f32.mrf.mxu0
      %v907 = vadd.f32 %v841, %v906
      %908 = vdwg.mxu0
      %909 = vmatpush.msra.mxu0 0.0
      %910 = vmatpush.msra.mxu0 0.0
      %911 = vmatpush.msra.mxu0 0.0
      %912 = vmatpush.msra.mxu0 0.0
      %913 = vmatpush.msra.mxu0 0.0
      %914 = vmatpush.msra.mxu0 0.0
      %915 = vmatpush.msra.mxu0 0.0
      %916 = vmatpush.msra.mxu0 0.0
      %917 = vmatpush.msra.mxu0 0.0
      %918 = vmatpush.msra.mxu0 0.0
      %919 = vmatpush.msra.mxu0 0.0
      %920 = vmatpush.msra.mxu0 0.0
      %921 = vmatpush.msra.mxu0 %v786
      %922 = vmatpush.msra.mxu0 %v784
      %923 = vmatpush.msra.mxu0 %v782
      %924 = vmatpush.msra.mxu0 %v780
      %925 = vmatmul.f32.gmra.mxu0 %v845
      %v926 = vpop.f32.mrf.mxu0
      %v927 = vadd.f32 %v806, %v926
      %928 = vmatmul.f32.gmra.mxu0 %v848
      %v929 = vpop.f32.mrf.mxu0
      %v930 = vadd.f32 %v811, %v929
      %931 = vmatmul.f32.gmra.mxu0 %v851
      %v932 = vpop.f32.mrf.mxu0
      %v933 = vadd.f32 %v816, %v932
      %934 = vmatmul.f32.gmra.mxu0 %v854
      %v935 = vpop.f32.mrf.mxu0
      %v936 = vadd.f32 %v821, %v935
      %937 = vmatmul.f32.gmra.mxu0 %v857
      %v938 = vpop.f32.mrf.mxu0
      %v939 = vadd.f32 %v826, %v938
      %940 = vmatmul.f32.gmra.mxu0 %v860
      %v941 = vpop.f32.mrf.mxu0
      %v942 = vadd.f32 %v831, %v941
      %943 = vmatmul.f32.gmra.mxu0 %v863
      %v944 = vpop.f32.mrf.mxu0
      %v945 = vadd.f32 %v836, %v944
      %946 = vmatmul.f32.gmra.mxu0 %v866
      %v947 = vpop.f32.mrf.mxu0
      %v948 = vadd.f32 %v841, %v947
      %949 = vdwg.mxu0
      %v950 = vadd.f32 %v252, %v886
      %v951 = vadd.f32 %v253, %v927
      %v952 = vadd.f32 %v254, %v889
      %v953 = vadd.f32 %v255, %v930
      %v954 = vadd.f32 %v256, %v892
      %v955 = vadd.f32 %v257, %v933
      %v956 = vadd.f32 %v258, %v895
      %v957 = vadd.f32 %v259, %v936
      %v958 = vadd.f32 %v260, %v898
      %v959 = vadd.f32 %v261, %v939
      %v960 = vadd.f32 %v262, %v901
      %v961 = vadd.f32 %v263, %v942
      %v962 = vadd.f32 %v264, %v904
      %v963 = vadd.f32 %v265, %v945
      %v964 = vadd.f32 %v266, %v907
      %v965 = vadd.f32 %v267, %v948
      %966 = vst [vmem:[%s251] sm:$0xff] %v950
      %967 = vst [vmem:[%s251 + $0x8] sm:$0xff] %v951
      %968 = vst [vmem:[%s251 + $0x10] sm:$0xff] %v952
      %969 = vst [vmem:[%s251 + $0x18] sm:$0xff] %v953
      %970 = vst [vmem:[%s251 + $0x20] sm:$0xff] %v954
      %971 = vst [vmem:[%s251 + $0x28] sm:$0xff] %v955
      %972 = vst [vmem:[%s251 + $0x30] sm:$0xff] %v956
      %973 = vst [vmem:[%s251 + $0x38] sm:$0xff] %v957
      %974 = vst [vmem:[%s251 + $0x40] sm:$0xff] %v958
      %975 = vst [vmem:[%s251 + $0x48] sm:$0xff] %v959
      %976 = vst [vmem:[%s251 + $0x50] sm:$0xff] %v960
      %977 = vst [vmem:[%s251 + $0x58] sm:$0xff] %v961
      %978 = vst [vmem:[%s251 + $0x60] sm:$0xff] %v962
      %979 = vst [vmem:[%s251 + $0x68] sm:$0xff] %v963
      %980 = vst [vmem:[%s251 + $0x70] sm:$0xff] %v964
      %981 = vst [vmem:[%s251 + $0x78] sm:$0xff] %v965
      %p982 = scmp.lt.s32.totalorder %s17, 1
      %s983 = scalar_select %p982, %s17, 1
      %s984 = smul.addr %s983, 16
      %s985 = smul.addr %s984, 8
      %s986 = scalar_lea.vmem %s6, %s985
      // Predicated region
      $region45: #{tc_forward.1} parent=43 // pred_check
        %p987 = pneg %p166
      $region46: #{tc_forward.1} parent=43 // pred_check_branch
        %989 = sbr.rel (%p987) target = $region48
      $region47: #{tc_forward.1} parent=43 // pred_region
        _
      $region48: #{tc_forward.1} parent=43 // pred_fallthru
        _
    $region44: #{tc_forward.1} parent=5 // pred_fallthru
      _
    %p990 = scmp.le.s32.totalorder 2, %s12
    // Predicated region
    $region49: #{tc_forward.1} parent=5 // pred_check
      %p991 = pneg %p990
    $region50: #{tc_forward.1} parent=5 // pred_check_branch
      %993 = sbr.rel (%p991) target = $region52
    $region51: #{tc_forward.1} parent=5 // pred_region
      %s994 = ssub.s32 %s12, 2
      // Predicated region
      $region53: #{tc_forward.1} parent=51 // pred_check
        %p995 = pneg %p172
      $region54: #{tc_forward.1} parent=51 // pred_check_branch
        %997 = sbr.rel (%p995) target = $region56
      $region55: #{tc_forward.1} parent=51 // pred_region
        %p998 = scmp.lt.s32.totalorder %s18, 1
        %s999 = scalar_select %p998, %s18, 1
        %s1000 = smul.addr %s999, 16
        %s1001 = smul.addr %s1000, 8
        %s1002 = scalar_lea.vmem %s6, %s1001
      $region56: #{tc_forward.1} parent=51 // pred_fallthru
        _
    $region52: #{tc_forward.1} parent=5 // pred_fallthru
      _
  $region6: #{tc_forward.1} parent=0 // loop_footer
    %s16 = sadd.s32 1, %s12
  $region7: #{tc_forward.1} parent=0 // loop_footer_branch
    %11 = sbr.rel target = $region3
  $region8: #{tc_forward.1} parent=0 // loop_exit
    _

</llo_original>
